<compile_context>
chip_gen: v7x
topology: tpu7x:2x2x1
jax: 0.10.0
libtpu: 0.0.40
codegen_flags: <defaults>
</compile_context>

<pallas_src>
import jax
import jax.numpy as jnp
from jax.experimental import pallas as pl
from jax.experimental.pallas import tpu as pltpu


_VMEM_LIMIT = 48 * 1024 * 1024          # safe on v7x (64 MiB phys) and v5e/v6e (128 MiB)
_FUSED_VMEM_BUDGET = 40 * 1024 * 1024   # headroom under the limit for the fused path


def _round_up(n, m):
    return ((n + m - 1) // m) * m


# ----------------------------- Fused kernel ----------------------------------

def _fused_kernel(x_ref, wt_ref, dep_ref, dist_ref, dep_sc, nj_sc):
    # x_ref:   [1, L_pad, E]   (resident per batch item)
    # wt_ref:  [E, D]          (resident)
    # dep_ref: [1, tq, D]
    # dist_ref:[1, tq, L_pad]
    # dep_sc:  [L_pad, D]      (VMEM scratch, per-batch resident dep)
    # nj_sc:   [1, L_pad] f32  (VMEM scratch, hoisted squared norms)
    i = pl.program_id(1)
    tq = dep_ref.shape[1]

    @pl.when(i == 0)
    def _():
        dep_full = jnp.dot(x_ref[0], wt_ref[...],
                           preferred_element_type=jnp.float32)        # [L_pad, D] f32
        nj_sc[...] = jnp.sum(dep_full * dep_full, axis=-1)[None, :]    # [1, L_pad]
        dep_sc[...] = dep_full.astype(dep_sc.dtype)

    row0 = pl.multiple_of(i * tq, tq)
    di = dep_sc[pl.ds(row0, tq), :]                                    # [tq, D]
    dep_ref[0] = di.astype(dep_ref.dtype)

    dif = di.astype(jnp.float32)
    ni = jnp.sum(dif * dif, axis=-1, keepdims=True)                    # [tq, 1]
    # Fold the -2 into the MXU operand; contract over the last dim of both
    # operands so no transpose of the resident slab is materialized.
    gram2 = jax.lax.dot_general(
        di * (-2.0), dep_sc[...],
        (((1,), (1,)), ((), ())),
        preferred_element_type=jnp.float32)                            # [tq, L_pad]
    dist = jnp.maximum(ni + nj_sc[...] + gram2, 0.0)                   # clamp cancellation noise
    dist_ref[0] = dist.astype(dist_ref.dtype)


def _fused_forward(x, wt, *, L, tq, L_pad, out_dtype):
    B, _, E = x.shape
    D = wt.shape[1]
    if L_pad != L:
        x = jnp.pad(x, ((0, 0), (0, L_pad - L), (0, 0)))

    dep, dist = pl.pallas_call(
        _fused_kernel,
        out_shape=(jax.ShapeDtypeStruct((B, L_pad, D), out_dtype),
                   jax.ShapeDtypeStruct((B, L_pad, L_pad), out_dtype)),
        grid=(B, L_pad // tq),
        in_specs=[
            pl.BlockSpec((1, L_pad, E), lambda b, i: (b, 0, 0)),   # x resident per batch
            pl.BlockSpec((E, D), lambda b, i: (0, 0)),             # weight resident
        ],
        out_specs=(
            pl.BlockSpec((1, tq, D), lambda b, i: (b, i, 0)),
            pl.BlockSpec((1, tq, L_pad), lambda b, i: (b, i, 0)),  # lane-dense L-wide rows
        ),
        scratch_shapes=[
            pltpu.VMEM((L_pad, D), x.dtype),
            pltpu.VMEM((1, L_pad), jnp.float32),
        ],
        compiler_params=pltpu.CompilerParams(
            dimension_semantics=("parallel", "arbitrary"),
            vmem_limit_bytes=_VMEM_LIMIT,
        ),
    )(x, wt)

    if L_pad != L:
        dep = dep[:, :L, :]
        dist = dist[:, :L, :L]
    return dep, dist


# ---------------- Fallback stage 1: dep = x @ W^T (padded, fixed tile) -------

def _linear_kernel(x_ref, w_ref, dep_ref):
    dep_ref[...] = jnp.dot(x_ref[...], w_ref[...],
                           preferred_element_type=jnp.float32).astype(dep_ref.dtype)


def _linear(x_flat, wt, *, out_dtype):
    M, E = x_flat.shape
    D = wt.shape[1]
    # Fixed MXU-shaped tile + zero padding: no full-extent fallback for odd M.
    tm = 256 if M > 256 else _round_up(M, 8)
    M_pad = _round_up(M, tm)
    if M_pad != M:
        x_flat = jnp.pad(x_flat, ((0, M_pad - M), (0, 0)))
    # TODO(synk): for extreme E*D, tile E as an "arbitrary" grid axis with a
    # VMEM f32 accumulator so the resident weight + 256-row x tile fit v7x VMEM.
    dep = pl.pallas_call(
        _linear_kernel,
        out_shape=jax.ShapeDtypeStruct((M_pad, D), out_dtype),
        grid=(M_pad // tm,),
        in_specs=[
            pl.BlockSpec((tm, E), lambda m: (m, 0)),
            pl.BlockSpec((E, D), lambda m: (0, 0)),
        ],
        out_specs=pl.BlockSpec((tm, D), lambda m: (m, 0)),
        compiler_params=pltpu.CompilerParams(
            dimension_semantics=("parallel",),
            vmem_limit_bytes=_VMEM_LIMIT,
        ),
    )(x_flat, wt)
    return dep[:M] if M_pad != M else dep


# ------- Fallback stage 2: pairwise sq. dists, resident dj + hoisted norms ---

def _dist_kernel(di_ref, dj_ref, dist_ref, nj_sc):
    # di_ref: [1, tq, D]; dj_ref: [1, L_pad, D] (resident per batch);
    # dist_ref: [1, tq, L_pad]; nj_sc: [1, L_pad] f32
    i = pl.program_id(1)

    @pl.when(i == 0)
    def _():
        djf = dj_ref[0].astype(jnp.float32)
        nj_sc[...] = jnp.sum(djf * djf, axis=-1)[None, :]

    di = di_ref[0]
    dif = di.astype(jnp.float32)
    ni = jnp.sum(dif * dif, axis=-1, keepdims=True)                    # [tq, 1]
    gram2 = jax.lax.dot_general(
        di * (-2.0), dj_ref[0],
        (((1,), (1,)), ((), ())),
        preferred_element_type=jnp.float32)                            # [tq, L_pad]
    dist_ref[0] = jnp.maximum(ni + nj_sc[...] + gram2, 0.0).astype(dist_ref.dtype)


def _pairwise_sq_dists(dep, *, out_dtype):
    B, L, D = dep.shape
    tq = 256 if L > 256 else _round_up(L, 8)
    L_pad = _round_up(L, tq)
    dep_p = jnp.pad(dep, ((0, 0), (0, L_pad - L), (0, 0))) if L_pad != L else dep

    dist = pl.pallas_call(
        _dist_kernel,
        out_shape=jax.ShapeDtypeStruct((B, L_pad, L_pad), out_dtype),
        grid=(B, L_pad // tq),
        in_specs=[
            pl.BlockSpec((1, tq, D), lambda b, i: (b, i, 0)),
            pl.BlockSpec((1, L_pad, D), lambda b, i: (b, 0, 0)),   # dj resident per batch
        ],
        out_specs=pl.BlockSpec((1, tq, L_pad), lambda b, i: (b, i, 0)),
        scratch_shapes=[pltpu.VMEM((1, L_pad), jnp.float32)],
        compiler_params=pltpu.CompilerParams(
            dimension_semantics=("parallel", "arbitrary"),
            vmem_limit_bytes=_VMEM_LIMIT,
        ),
    )(dep_p, dep_p)

    return dist[:, :L, :L] if L_pad != L else dist


# ------------------------------- Wrapper --------------------------------------

def rooted_graph_predictor_forward(emb_sentences, weight, *,
                                   use_bf16_matmul=False, force_two_stage=False):
    """emb_sentences: [B, L, E]; weight: [D, E] (torch Linear layout, no bias).

    Returns (dep_embeddings [B, L, D], distances [B, L, L]).
    use_bf16_matmul=True feeds the MXU bf16 on v5e/v6e/v7x (f32 accumulation and
    f32 norms/epilogue kept); default keeps exact f32 semantics.
    """
    B, L, E = emb_sentences.shape
    D = weight.shape[0]
    in_dtype = emb_sentences.dtype
    mm_dtype = jnp.bfloat16 if use_bf16_matmul else in_dtype

    wt = weight.T.astype(mm_dtype)                    # [E, D]

    tq = 256 if L > 256 else _round_up(L, 8)
    L_pad = _round_up(L, tq)

    mm_sz = jnp.dtype(mm_dtype).itemsize
    out_sz = jnp.dtype(in_dtype).itemsize
    fused_bytes = (2 * L_pad * E * mm_sz      # resident x slab, double-buffered
                   + 2 * E * D * mm_sz        # resident weight, double-buffered
                   + 2 * tq * D * out_sz      # dep output tile
                   + 2 * tq * L_pad * out_sz  # dist output tile
                   + L_pad * D * mm_sz        # dep scratch
                   + L_pad * 4 + 8192)        # norm scratch + slack

    if not force_two_stage and fused_bytes <= _FUSED_VMEM_BUDGET:
        return _fused_forward(emb_sentences.astype(mm_dtype), wt,
                              L=L, tq=tq, L_pad=L_pad, out_dtype=in_dtype)

    # Two-stage fallback for shapes whose resident slabs would overflow VMEM.
    x_flat = emb_sentences.reshape(B * L, E).astype(mm_dtype)
    dep = _linear(x_flat, wt, out_dtype=mm_dtype).reshape(B, L, D)
    dist = _pairwise_sq_dists(dep, out_dtype=in_dtype)
    return dep.astype(in_dtype), dist


# TODO(synk): `to_graph` is a host-side, data-dependent greedy MST-style loop
# (Python lists, argmin over a shrinking index set); it is not part of forward
# and has no clean Pallas equivalent, so it is intentionally not implemented.


if __name__ == "__main__":
    # Small shapes consistent with the module: batch=2, seq=8, emb_dim=32, out_dim=16
    B, L, E, D = 2, 8, 32, 16

    key = jax.random.PRNGKey(0)
    kx, kw, kx2 = jax.random.split(key, 3)
    emb_sentences = jax.random.normal(kx, (B, L, E), dtype=jnp.float32)
    # Deterministic init of the Linear(E -> D, bias=False) weight, torch layout [D, E].
    weight = (jax.random.uniform(kw, (D, E), dtype=jnp.float32) - 0.5) * (2.0 / (E ** 0.5))

    def reference(x, w):
        dep = x @ w.T
        diff = dep[:, :, None, :] - dep[:, None, :, :]
        return dep, jnp.sum(diff ** 2, axis=-1)

    dep_ref, dist_ref = reference(emb_sentences, weight)

    # Fused single-kernel path (default for small/medium shapes).
    dep, dist = rooted_graph_predictor_forward(emb_sentences, weight)
    jax.block_until_ready((dep, dist))
    assert dep.shape == (B, L, D) and dist.shape == (B, L, L)
    assert jnp.allclose(dep, dep_ref, atol=1e-5, rtol=1e-5)
    assert jnp.allclose(dist, dist_ref, atol=1e-3, rtol=1e-3)

    # Two-stage fallback path (used when resident slabs would overflow VMEM).
    dep2, dist2 = rooted_graph_predictor_forward(emb_sentences, weight, force_two_stage=True)
    jax.block_until_ready((dep2, dist2))
    assert jnp.allclose(dep2, dep_ref, atol=1e-5, rtol=1e-5)
    assert jnp.allclose(dist2, dist_ref, atol=1e-3, rtol=1e-3)

    # Ragged sequence length exercises the zero-padding in both paths.
    L2 = 13
    emb2 = jax.random.normal(kx2, (B, L2, E), dtype=jnp.float32)
    dep_ref3, dist_ref3 = reference(emb2, weight)
    dep3, dist3 = rooted_graph_predictor_forward(emb2, weight)
    dep4, dist4 = rooted_graph_predictor_forward(emb2, weight, force_two_stage=True)
    jax.block_until_ready((dep3, dist3, dep4, dist4))
    assert dep3.shape == (B, L2, D) and dist3.shape == (B, L2, L2)
    assert jnp.allclose(dep3, dep_ref3, atol=1e-5, rtol=1e-5)
    assert jnp.allclose(dist3, dist_ref3, atol=1e-3, rtol=1e-3)
    assert jnp.allclose(dep4, dep_ref3, atol=1e-5, rtol=1e-5)
    assert jnp.allclose(dist4, dist_ref3, atol=1e-3, rtol=1e-3)

    print("KERNEL_OK")
</pallas_src>

<mosaic_0001>
module attributes {stable_mosaic.version = 11 : i64} {
  func.func @_fused_kernel(%arg0: i32, %arg1: i32, %arg2: memref<1x8x32xf32, #tpu.memory_space<vmem>>, %arg3: memref<32x16xf32, #tpu.memory_space<vmem>>, %arg4: memref<1x8x16xf32, #tpu.memory_space<vmem>>, %arg5: memref<1x8x8xf32, #tpu.memory_space<vmem>>, %arg6: memref<8x16xf32, #tpu.memory_space<vmem>>, %arg7: memref<1x8xf32, #tpu.memory_space<vmem>>) attributes {dimension_semantics = [#tpu.dimension_semantics<parallel>, #tpu.dimension_semantics<arbitrary>], iteration_bounds = array<i64: 2, 1>, scalar_prefetch = 0 : i64, scratch_operands = 2 : i64, tpu.core_type = #tpu.core_type<tc>, window_params = [{transform_indices = @transform_0, window_bounds = array<i64: 1, 8, 32>}, {pipeline_mode = #tpu.pipeline_mode<synchronous>, transform_indices = @transform_1, window_bounds = array<i64: 32, 16>}, {transform_indices = @transform_2, window_bounds = array<i64: 1, 8, 16>}, {transform_indices = @transform_3, window_bounds = array<i64: 1, 8, 8>}]} {
    %c0_i32 = arith.constant 0 : i32
    %0 = arith.cmpi eq, %arg1, %c0_i32 : i32
    %1 = arith.extui %0 : i1 to i32
    %c0_i32_0 = arith.constant 0 : i32
    %2 = arith.cmpi ne, %1, %c0_i32_0 : i32
    scf.if %2 {
      %c0_14 = arith.constant 0 : index
      %c0_15 = arith.constant 0 : index
      %c0_16 = arith.constant 0 : index
      %27 = vector.load %arg2[%c0_14, %c0_15, %c0_16] : memref<1x8x32xf32, #tpu.memory_space<vmem>>, vector<1x8x32xf32>
      %28 = vector.shape_cast %27 : vector<1x8x32xf32> to vector<8x32xf32>
      %c0_17 = arith.constant 0 : index
      %c0_18 = arith.constant 0 : index
      %29 = vector.load %arg3[%c0_17, %c0_18] : memref<32x16xf32, #tpu.memory_space<vmem>>, vector<32x16xf32>
      %cst_19 = arith.constant dense<0.000000e+00> : vector<8x16xf32>
      %30 = tpu.matmul %28, %29, %cst_19 {dimension_numbers = #tpu.dot_dimension_numbers<[1], [0], [0], [1], [0, 0, 1, 1], [], []>} : vector<8x32xf32>, vector<32x16xf32>, vector<8x16xf32> -> vector<8x16xf32>
      %31 = arith.mulf %30, %30 : vector<8x16xf32>
      %cst_20 = arith.constant dense<0.000000e+00> : vector<8xf32>
      %32 = vector.multi_reduction <add>, %31, %cst_20 [1] : vector<8x16xf32> to vector<8xf32>
      %33 = vector.shape_cast %32 : vector<8xf32> to vector<1x8xf32>
      %c0_21 = arith.constant 0 : index
      %c0_22 = arith.constant 0 : index
      %34 = vector.load %arg7[%c0_21, %c0_22] : memref<1x8xf32, #tpu.memory_space<vmem>>, vector<1x8xf32>
      tpu.vector_store %arg7[%c0_21, %c0_22], %33 {strides = array<i32>} : memref<1x8xf32, #tpu.memory_space<vmem>>, vector<1x8xf32>,
      %c0_23 = arith.constant 0 : index
      %c0_24 = arith.constant 0 : index
      %35 = vector.load %arg6[%c0_23, %c0_24] : memref<8x16xf32, #tpu.memory_space<vmem>>, vector<8x16xf32>
      tpu.vector_store %arg6[%c0_23, %c0_24], %30 {strides = array<i32>} : memref<8x16xf32, #tpu.memory_space<vmem>>, vector<8x16xf32>,
    } else {
    }
    %c8_i32 = arith.constant 8 : i32
    %3 = arith.muli %arg1, %c8_i32 : i32
    %4 = tpu.assume_multiple %3, 8 : i32
    %5 = arith.index_cast %4 : i32 to index
    %c0 = arith.constant 0 : index
    %6 = vector.load %arg6[%5, %c0] : memref<8x16xf32, #tpu.memory_space<vmem>>, vector<8x16xf32>
    %c0_1 = arith.constant 0 : index
    %c0_2 = arith.constant 0 : index
    %c0_3 = arith.constant 0 : index
    %7 = vector.load %arg4[%c0_1, %c0_2, %c0_3] : memref<1x8x16xf32, #tpu.memory_space<vmem>>, vector<1x8x16xf32>
    %8 = vector.shape_cast %7 : vector<1x8x16xf32> to vector<8x16xf32>
    %9 = vector.shape_cast %6 : vector<8x16xf32> to vector<1x8x16xf32>
    tpu.vector_store %arg4[%c0_1, %c0_2, %c0_3], %9 {strides = array<i32>} : memref<1x8x16xf32, #tpu.memory_space<vmem>>, vector<1x8x16xf32>,
    %10 = arith.mulf %6, %6 : vector<8x16xf32>
    %cst = arith.constant dense<0.000000e+00> : vector<8xf32>
    %11 = vector.multi_reduction <add>, %10, %cst [1] : vector<8x16xf32> to vector<8xf32>
    %12 = vector.shape_cast %11 : vector<8xf32> to vector<8x1xf32>
    %cst_4 = arith.constant -2.000000e+00 : f32
    %13 = vector.broadcast %cst_4 : f32 to vector<8x16xf32>
    %14 = arith.mulf %6, %13 : vector<8x16xf32>
    %c0_5 = arith.constant 0 : index
    %c0_6 = arith.constant 0 : index
    %15 = vector.load %arg6[%c0_5, %c0_6] : memref<8x16xf32, #tpu.memory_space<vmem>>, vector<8x16xf32>
    %cst_7 = arith.constant dense<0.000000e+00> : vector<8x8xf32>
    %16 = tpu.matmul %14, %15, %cst_7 {dimension_numbers = #tpu.dot_dimension_numbers<[1], [1], [0], [0], [0, 0, 1, 0], [], []>} : vector<8x16xf32>, vector<8x16xf32>, vector<8x8xf32> -> vector<8x8xf32>
    %c0_8 = arith.constant 0 : index
    %c0_9 = arith.constant 0 : index
    %17 = vector.load %arg7[%c0_8, %c0_9] : memref<1x8xf32, #tpu.memory_space<vmem>>, vector<1x8xf32>
    %18 = vector.broadcast %12 : vector<8x1xf32> to vector<8x8xf32>
    %19 = vector.broadcast %17 : vector<1x8xf32> to vector<8x8xf32>
    %20 = arith.addf %18, %19 : vector<8x8xf32>
    %21 = arith.addf %20, %16 : vector<8x8xf32>
    %cst_10 = arith.constant 0.000000e+00 : f32
    %22 = vector.broadcast %cst_10 : f32 to vector<8x8xf32>
    %23 = arith.maximumf %21, %22 : vector<8x8xf32>
    %c0_11 = arith.constant 0 : index
    %c0_12 = arith.constant 0 : index
    %c0_13 = arith.constant 0 : index
    %24 = vector.load %arg5[%c0_11, %c0_12, %c0_13] : memref<1x8x8xf32, #tpu.memory_space<vmem>>, vector<1x8x8xf32>
    %25 = vector.shape_cast %24 : vector<1x8x8xf32> to vector<8x8xf32>
    %26 = vector.shape_cast %23 : vector<8x8xf32> to vector<1x8x8xf32>
    tpu.vector_store %arg5[%c0_11, %c0_12, %c0_13], %26 {strides = array<i32>} : memref<1x8x8xf32, #tpu.memory_space<vmem>>, vector<1x8x8xf32>,
    return
  }
  func.func @transform_0(%arg0: i32, %arg1: i32) -> (i32, i32, i32) {
    %c0_i32 = arith.constant 0 : i32
    %c0_i32_0 = arith.constant 0 : i32
    %c0_i32_1 = arith.constant 0 : i32
    return %arg0, %c0_i32, %c0_i32_0 : i32, i32, i32
  }
  func.func @transform_1(%arg0: i32, %arg1: i32) -> (i32, i32) {
    %c0_i32 = arith.constant 0 : i32
    %c0_i32_0 = arith.constant 0 : i32
    %c0_i32_1 = arith.constant 0 : i32
    return %c0_i32, %c0_i32_0 : i32, i32
  }
  func.func @transform_2(%arg0: i32, %arg1: i32) -> (i32, i32, i32) {
    %c0_i32 = arith.constant 0 : i32
    %c0_i32_0 = arith.constant 0 : i32
    return %arg0, %arg1, %c0_i32 : i32, i32, i32
  }
  func.func @transform_3(%arg0: i32, %arg1: i32) -> (i32, i32, i32) {
    %c0_i32 = arith.constant 0 : i32
    %c0_i32_0 = arith.constant 0 : i32
    return %arg0, %arg1, %c0_i32 : i32, i32, i32
  }
}

</mosaic_0001>

<llo_original>
// kernel: tpu_custom_call.1
$region0: #{tpu_custom_call.1}
  #allocation0 [shape = 'u32[]', space=smem, size = 0x4, offset = 0x4, fixed_abs, tag = 'smem constant byte address 0x4 - core index']
  #allocation1 [shape = 'u32[144,128]{1,0:T(1,128)}', space=vmem, size = 0x12000, scoped, tag = 'internal scratch']
  #allocation2 [shape = 'f32[8,16]{1,0:T(8,128)}', space=vmem, size = 0x1000, scoped, tag = 'scratch operand']
  #allocation3 [shape = 'f32[1,8]{1,0:T(1,128)}', space=vmem, size = 0x200, scoped, tag = 'scratch operand']
  %s0 = inlined_call_operand.vmem [shape: f32[2,8,32], index: 0, kind: input, shape index: {}]
  %s1 = inlined_call_operand.vmem [shape: f32[32,16], index: 1, kind: input, shape index: {}]
  %s2 = inlined_call_operand.hbm [shape: f32[2,8,16], index: 2, kind: output, shape index: {0}]
  %s3 = inlined_call_operand.hbm [shape: f32[2,8,8], index: 3, kind: output, shape index: {1}]
  %4 = xla_tuple %s2, %s3
  %s5 = sld [smem:[#allocation0]]
  $region53: #{tpu_custom_call.1} parent=0
    _
  %s7 = ssub.s32 1, %s5
  %s8 = scalar_select 0, %s7, %s5
  $region1: #{tpu_custom_call.1} parent=0
    #allocation4 [shape = 'u8[8192]{0}', space=vmem, size = 0x2000, scoped, tag = 'output window, operand 0']
    #allocation5 [shape = 's32[2]{0}', space=sflag, size = 0x8, scoped, tag = 'scoped memory for tpu_custom_call.1']
    #allocation6 [shape = 'u8[8192]{0}', space=vmem, size = 0x2000, scoped, tag = 'output window, operand 1']
    #allocation7 [shape = 's32[2]{0}', space=sflag, size = 0x8, scoped, tag = 'scoped memory for tpu_custom_call.1']
    %9 = vsyncpa [#allocation5], 0
    %s10 = scalar_lea.sflag [#allocation5], 1
    %11 = vsyncpa %s10, 0
    %12 = vsyncpa [#allocation7], 0
    %s13 = scalar_lea.sflag [#allocation7], 1
    %14 = vsyncpa %s13, 0
    loop: start=0, step=1, limit=4
    $region2: #{tpu_custom_call.1} parent=1 // loop_pre_header
      _
    $region3: #{tpu_custom_call.1} parent=1 // loop_header
      %s16 = sphi 0, %s20
      %p17 = scmp.ge.s32.totalorder %s16, 4
      %s23 = sphi 0, %s35
      %s24 = sphi 0, %s31
      %s25 = sphi 0, %s23
      %s26 = sphi 0, %s24
      %s27 = sphi 0, %s25
      %s28 = sphi 0, %s26
      %s38 = sphi 0, %s40
      %s41 = sphi 0, %s38
      %s42 = sphi 0, %s41
      %s58 = sphi 0, %s42
      %s62 = sphi 0, %s62
      %s64 = sphi 0, %s62
      %s65 = sphi 0, %s64
      %s79 = sphi 0, %s65
      %s87 = sphi 0, %s89
      %s90 = sphi 0, %s87
      %s91 = sphi 0, %s90
      %s107 = sphi 0, %s91
      %s115 = sphi 0, %s117
      %s118 = sphi 0, %s115
      %s119 = sphi 0, %s118
      %s135 = sphi 0, %s119
    $region4: #{tpu_custom_call.1} parent=1 // loop_header_branch
      %19 = sbr.rel (%p17) target = $region8
    $region5: #{tpu_custom_call.1} parent=1 // loop_body
      %s21 = ssub.s32 %s16, 1
      %s22 = ssub.s32 %s16, 2
      %s29 = sadd.s32 1, %s24
      %p30 = scmp.ge.s32.totalorder %s29, 1
      %s31 = scalar_select %p30, 0, %s29
      %s32 = sadd.s32 1, %s23
      %s33 = scalar_select %p30, %s32, %s23
      %p34 = scmp.ge.s32.totalorder %s33, 2
      %s35 = scalar_select %p34, 0, %s33
      %s36 = ssub.s32 %s23, %s35
      %p37 = scmp.eq.s32.totalorder %s36, 0
      %s39 = sadd.s32 %s38, 1
      %s40 = scalar_select %p37, %s38, %s39
      %p43 = pneg %p37
      %p44 = scmp.eq.s32.totalorder %s16, 1
      %p45 = por %p43, %p44
      %p46 = scmp.ne.s32.totalorder %s38, %s41
      %p47 = scmp.eq.s32.totalorder %s16, 0
      %p48 = por %p46, %p47
      %p49 = scmp.ne.s32.totalorder %s38, %s41
      %p50 = scmp.eq.s32.totalorder %s21, 1
      %p51 = por %p49, %p50
      %p52 = scmp.ne.s32.totalorder %s41, %s42
      %p53 = scmp.eq.s32.totalorder %s21, 0
      %p54 = por %p52, %p53
      %p55 = scmp.ne.s32.totalorder %s41, %s42
      %p56 = scmp.eq.s32.totalorder %s22, 1
      %p57 = por %p55, %p56
      %p59 = scmp.ne.s32.totalorder %s42, %s58
      %p60 = scmp.eq.s32.totalorder %s22, 0
      %p61 = por %p59, %p60
      %s63 = sadd.s32 %s62, 1
      %p66 = scmp.eq.s32.totalorder %s16, 1
      %p67 = scmp.ne.s32.totalorder %s62, %s64
      %p68 = scmp.eq.s32.totalorder %s16, 0
      %p69 = por %p67, %p68
      %p70 = scmp.ne.s32.totalorder %s62, %s64
      %p71 = scmp.eq.s32.totalorder %s21, 1
      %p72 = por %p70, %p71
      %p73 = scmp.ne.s32.totalorder %s64, %s65
      %p74 = scmp.eq.s32.totalorder %s21, 0
      %p75 = por %p73, %p74
      %p76 = scmp.ne.s32.totalorder %s64, %s65
      %p77 = scmp.eq.s32.totalorder %s22, 1
      %p78 = por %p76, %p77
      %p80 = scmp.ne.s32.totalorder %s65, %s79
      %p81 = scmp.eq.s32.totalorder %s22, 0
      %p82 = por %p80, %p81
      %s83 = ssub.s32 %s23, %s35
      %s84 = ssub.s32 %s24, %s31
      %s85 = sor.u32 %s83, %s84
      %p86 = scmp.eq.s32.totalorder %s85, 0
      %s88 = sadd.s32 %s87, 1
      %s89 = scalar_select %p86, %s87, %s88
      %p92 = pneg %p86
      %p93 = scmp.eq.s32.totalorder %s16, 1
      %p94 = por %p92, %p93
      %p95 = scmp.ne.s32.totalorder %s87, %s90
      %p96 = scmp.eq.s32.totalorder %s16, 0
      %p97 = por %p95, %p96
      %p98 = scmp.ne.s32.totalorder %s87, %s90
      %p99 = scmp.eq.s32.totalorder %s21, 1
      %p100 = por %p98, %p99
      %p101 = scmp.ne.s32.totalorder %s90, %s91
      %p102 = scmp.eq.s32.totalorder %s21, 0
      %p103 = por %p101, %p102
      %p104 = scmp.ne.s32.totalorder %s90, %s91
      %p105 = scmp.eq.s32.totalorder %s22, 1
      %p106 = por %p104, %p105
      %p108 = scmp.ne.s32.totalorder %s91, %s107
      %p109 = scmp.eq.s32.totalorder %s22, 0
      %p110 = por %p108, %p109
      %s111 = ssub.s32 %s23, %s35
      %s112 = ssub.s32 %s24, %s31
      %s113 = sor.u32 %s111, %s112
      %p114 = scmp.eq.s32.totalorder %s113, 0
      %s116 = sadd.s32 %s115, 1
      %s117 = scalar_select %p114, %s115, %s116
      %p120 = pneg %p114
      %p121 = scmp.eq.s32.totalorder %s16, 1
      %p122 = por %p120, %p121
      %p123 = scmp.ne.s32.totalorder %s115, %s118
      %p124 = scmp.eq.s32.totalorder %s16, 0
      %p125 = por %p123, %p124
      %p126 = scmp.ne.s32.totalorder %s115, %s118
      %p127 = scmp.eq.s32.totalorder %s21, 1
      %p128 = por %p126, %p127
      %p129 = scmp.ne.s32.totalorder %s118, %s119
      %p130 = scmp.eq.s32.totalorder %s21, 0
      %p131 = por %p129, %p130
      %p132 = scmp.ne.s32.totalorder %s118, %s119
      %p133 = scmp.eq.s32.totalorder %s22, 1
      %p134 = por %p132, %p133
      %p136 = scmp.ne.s32.totalorder %s119, %s135
      %p137 = scmp.eq.s32.totalorder %s22, 0
      %p138 = por %p136, %p137
      %p139 = scmp.le.s32.totalorder 1, %s16
      %p140 = scmp.lt.s32.totalorder %s16, 3
      %p141 = pnand %p139, %p140
      %p142 = pneg %p141
      // Predicated region
      $region9: #{tpu_custom_call.1} parent=5 // pred_check
        _
      $region10: #{tpu_custom_call.1} parent=5 // pred_check_branch
        %144 = sbr.rel (%p141) target = $region12
      $region11: #{tpu_custom_call.1} parent=5 // pred_region
        %s145 = ssub.s32 %s16, 1
        // Predicated region
        $region13: #{tpu_custom_call.1} parent=11 // pred_check
          %p146 = pneg %p75
        $region14: #{tpu_custom_call.1} parent=11 // pred_check_branch
          %148 = sbr.rel (%p146) target = $region16
        $region15: #{tpu_custom_call.1} parent=11 // pred_region
          _
        $region16: #{tpu_custom_call.1} parent=11 // pred_fallthru
          _
      $region12: #{tpu_custom_call.1} parent=5 // pred_fallthru
        _
      %p149 = scmp.lt.s32.totalorder %s16, 2
      // Predicated region
      $region17: #{tpu_custom_call.1} parent=5 // pred_check
        %p150 = pneg %p149
      $region18: #{tpu_custom_call.1} parent=5 // pred_check_branch
        %152 = sbr.rel (%p150) target = $region20
      $region19: #{tpu_custom_call.1} parent=5 // pred_region
        // Predicated region
        $region21: #{tpu_custom_call.1} parent=19 // pred_check
          %p153 = pneg %p48
        $region22: #{tpu_custom_call.1} parent=19 // pred_check_branch
          %155 = sbr.rel (%p153) target = $region24
        $region23: #{tpu_custom_call.1} parent=19 // pred_region
          %p156 = scmp.lt.s32.totalorder %s23, 1
          %s157 = scalar_select %p156, %s23, 1
          %s158 = smul.addr %s157, 8
          %s159 = scalar_lea.vmem %s0, %s158
        $region24: #{tpu_custom_call.1} parent=19 // pred_fallthru
          _
      $region20: #{tpu_custom_call.1} parent=5 // pred_fallthru
        _
      %p160 = scmp.le.s32.totalorder 1, %s16
      %p161 = scmp.lt.s32.totalorder %s16, 3
      %p162 = pnand %p160, %p161
      %p163 = pneg %p162
      // Predicated region
      $region25: #{tpu_custom_call.1} parent=5 // pred_check
        _
      $region26: #{tpu_custom_call.1} parent=5 // pred_check_branch
        %165 = sbr.rel (%p162) target = $region28
      $region27: #{tpu_custom_call.1} parent=5 // pred_region
        %s166 = ssub.s32 %s16, 1
        %p167 = scmp.lt.s32.totalorder %s25, 1
        %s168 = scalar_select %p167, %s25, 1
        %s169 = smul.addr %s168, 8
        %s170 = scalar_lea.vmem %s0, %s169
        %p171 = pneg %p54
        %p172 = pneg %p51
        %p173 = pneg %p75
        %p174 = pneg %p72
        %p175 = pneg %p103
        %p176 = pneg %p100
        %s177 = sand.u32 %s90, 1
        %s178 = scalar_lea.sflag [#allocation5], %s177
        %s179 = sand.u32 %s90, 1
        %s180 = smul.addr %s179, 8
        %s181 = scalar_lea.vmem [#allocation4], %s180
        %p182 = pneg %p131
        %p183 = pneg %p128
        %s184 = sand.u32 %s118, 1
        %s185 = scalar_lea.sflag [#allocation7], %s184
        %s186 = sand.u32 %s118, 1
        %s187 = smul.addr %s186, 8
        %s188 = scalar_lea.vmem [#allocation6], %s187
        %p189 = scmp.lt.s32.totalorder %s25, 1
        %s190 = scalar_select %p189, %s25, 1
        %s191 = smul.addr %s190, 8
        %s192 = scalar_lea.vmem %s0, %s191
        %p193 = scmp.eq.s32.totalorder %s26, 0
        // Predicated region
        $region29: #{tpu_custom_call.1} parent=27 // pred_check
          %p194 = pneg %p193
        $region30: #{tpu_custom_call.1} parent=27 // pred_check_branch
          %196 = sbr.rel (%p194) target = $region32
        $region31: #{tpu_custom_call.1} parent=27 // pred_region
          %v197 = vld [vmem:[%s192] sm:$0xff]
          %v198 = vld [vmem:[%s1] sm:$0xff]
          %v199 = vld [vmem:[%s1 + $0x8] sm:$0xff]
          %v200 = vld [vmem:[%s1 + $0x10] sm:$0xff]
          %v201 = vld [vmem:[%s1 + $0x18] sm:$0xff]
          %vm202 = vcmask 261120
          %v204 = vsel %vm202, %v197, 0
          %206 = vmatprep.subr.mxu0 0.0
          %207 = vmatpush1.msra.mxu0 %v198
          %208 = vmatprep.subr.mxu0 0.0
          %209 = vmatpush1.msra.mxu0 %v199
          %210 = vmatprep.subr.mxu0 0.0
          %211 = vmatpush1.msra.mxu0 %v200
          %212 = vmatprep.subr.mxu0 0.0
          %213 = vmatpush1.msra.mxu0 %v201
          %214 = vmatprep.subr.mxu0 0.0
          %215 = vmatpush1.msra.mxu0 0.0
          %216 = vmatprep.subr.mxu0 0.0
          %217 = vmatpush1.msra.mxu0 0.0
          %218 = vmatprep.subr.mxu0 0.0
          %219 = vmatpush1.msra.mxu0 0.0
          %220 = vmatprep.subr.mxu0 0.0
          %221 = vmatpush1.msra.mxu0 0.0
          %222 = vmatprep.subr.mxu0 0.0
          %223 = vmatpush1.msra.mxu0 0.0
          %224 = vmatprep.subr.mxu0 0.0
          %225 = vmatpush1.msra.mxu0 0.0
          %226 = vmatprep.subr.mxu0 0.0
          %227 = vmatpush1.msra.mxu0 0.0
          %228 = vmatprep.subr.mxu0 0.0
          %229 = vmatpush1.msra.mxu0 0.0
          %230 = vmatprep.subr.mxu0 0.0
          %231 = vmatpush1.msra.mxu0 0.0
          %232 = vmatprep.subr.mxu0 0.0
          %233 = vmatpush1.msra.mxu0 0.0
          %234 = vmatprep.subr.mxu0 0.0
          %235 = vmatpush1.msra.mxu0 0.0
          %236 = vmatprep.subr.mxu0 0.0
          %237 = vmatpush1.msra.mxu0 0.0
          %238 = vmatprep.subr.mxu0 0.0
          %239 = vmatpush1.msra.mxu0 0.0
          %240 = vmatprep.subr.mxu0 0.0
          %241 = vmatpush1.msra.mxu0 0.0
          %242 = vmatprep.subr.mxu0 0.0
          %243 = vmatpush1.msra.mxu0 0.0
          %244 = vmatprep.subr.mxu0 0.0
          %245 = vmatpush1.msra.mxu0 0.0
          %246 = vmatprep.subr.mxu0 0.0
          %247 = vmatpush1.msra.mxu0 0.0
          %248 = vmatprep.subr.mxu0 0.0
          %249 = vmatpush1.msra.mxu0 0.0
          %250 = vmatprep.subr.mxu0 0.0
          %251 = vmatpush1.msra.mxu0 0.0
          %252 = vmatprep.subr.mxu0 0.0
          %253 = vmatpush1.msra.mxu0 0.0
          %254 = vmatprep.subr.mxu0 0.0
          %255 = vmatpush1.msra.mxu0 0.0
          %256 = vmatprep.subr.mxu0 0.0
          %257 = vmatpush1.msra.mxu0 0.0
          %258 = vmatprep.subr.mxu0 0.0
          %259 = vmatpush1.msra.mxu0 0.0
          %260 = vmatprep.subr.mxu0 0.0
          %261 = vmatpush1.msra.mxu0 0.0
          %262 = vmatprep.subr.mxu0 0.0
          %263 = vmatpush1.msra.mxu0 0.0
          %264 = vmatprep.subr.mxu0 0.0
          %265 = vmatpush1.msra.mxu0 0.0
          %266 = vmatprep.subr.mxu0 0.0
          %267 = vmatpush1.msra.mxu0 0.0
          %268 = vmatprep.subr.mxu0 0.0
          %269 = vmatpush1.msra.mxu0 0.0
          %270 = vmatprep.mubr.f32.mxu0 0.0
          %271 = vmatmul.mubr.f32.gmra.mrb[0].mxu0 %v204
          %v272 = vpop.f32.mrb[0].mxu0
          %v273 = vadd.f32 0.0, %v272
          %v274 = vpop.f32.mrb[0].mxu0
          %275 = vdwg.mxu0
          %v276 = vmul.f32 %v273, %v273
          %vm277 = vcmask 130048
          %v278 = vsel %vm277, %v276, 0.0
          %279 = vadd.xlane.f32.xlu0 %v278
          %v280 = vpop.xlane.xlu0 %279
          %v282 = vlaneseq
          %v283 = vand.u32 %v282, 127
          %v284 = vlaneseq
          %v285 = vshrl.u32 %v284, 7
          %v286 = vsub.s32 %v283, %v285
          %v287 = vrot.slane %v280, %v286
          %vm289 = vcmask 57344
          %290 = vst.msk [vmem:[#allocation3] sm:$0x1] %vm289, %v287
          %291 = vst.msk [vmem:[#allocation2] sm:$0xff] %vm277, %v273
        $region32: #{tpu_custom_call.1} parent=27 // pred_fallthru
          _
        %s292 = smul.u32 %s26, 8
        %s293 = scalar_lea.vmem [#allocation2], %s292
        %v294 = vld [vmem:[%s293] sm:$0xff]
        %vm295 = vcmask 130048
        %296 = vst.msk [vmem:[%s181] sm:$0xff] %vm295, %v294
        %v297 = vmul.f32 %v294, %v294
        %v298 = vsel %vm295, %v297, 0.0
        %299 = vadd.xlane.f32.xlu0 %v298
        %v300 = vpop.xlane.xlu0 %299
        %v301 = vmul.f32 %v294, -2.0
        %v302 = vld [vmem:[#allocation2] sm:$0xff]
        %v304 = vsel %vm295, %v301, 0
        %v307 = vsel %vm295, %v302, 0
        %309 = vmatprep.subr.mxu0 0.0
        %310 = vmatpush1.xpose.msra.mxu0 %v307
        %311 = vmatprep.subr.mxu0 0.0
        %312 = vmatpush1.xpose.msra.mxu0 0.0
        %313 = vmatprep.subr.mxu0 0.0
        %314 = vmatpush1.xpose.msra.mxu0 0.0
        %315 = vmatprep.subr.mxu0 0.0
        %316 = vmatpush1.xpose.msra.mxu0 0.0
        %317 = vmatprep.subr.mxu0 0.0
        %318 = vmatpush1.xpose.msra.mxu0 0.0
        %319 = vmatprep.subr.mxu0 0.0
        %320 = vmatpush1.xpose.msra.mxu0 0.0
        %321 = vmatprep.subr.mxu0 0.0
        %322 = vmatpush1.xpose.msra.mxu0 0.0
        %323 = vmatprep.subr.mxu0 0.0
        %324 = vmatpush1.xpose.msra.mxu0 0.0
        %325 = vmatprep.subr.mxu0 0.0
        %326 = vmatpush1.xpose.msra.mxu0 0.0
        %327 = vmatprep.subr.mxu0 0.0
        %328 = vmatpush1.xpose.msra.mxu0 0.0
        %329 = vmatprep.subr.mxu0 0.0
        %330 = vmatpush1.xpose.msra.mxu0 0.0
        %331 = vmatprep.subr.mxu0 0.0
        %332 = vmatpush1.xpose.msra.mxu0 0.0
        %333 = vmatprep.subr.mxu0 0.0
        %334 = vmatpush1.xpose.msra.mxu0 0.0
        %335 = vmatprep.subr.mxu0 0.0
        %336 = vmatpush1.xpose.msra.mxu0 0.0
        %337 = vmatprep.subr.mxu0 0.0
        %338 = vmatpush1.xpose.msra.mxu0 0.0
        %339 = vmatprep.subr.mxu0 0.0
        %340 = vmatpush1.xpose.msra.mxu0 0.0
        %341 = vmatprep.subr.mxu0 0.0
        %342 = vmatpush1.xpose.msra.mxu0 0.0
        %343 = vmatprep.subr.mxu0 0.0
        %344 = vmatpush1.xpose.msra.mxu0 0.0
        %345 = vmatprep.subr.mxu0 0.0
        %346 = vmatpush1.xpose.msra.mxu0 0.0
        %347 = vmatprep.subr.mxu0 0.0
        %348 = vmatpush1.xpose.msra.mxu0 0.0
        %349 = vmatprep.subr.mxu0 0.0
        %350 = vmatpush1.xpose.msra.mxu0 0.0
        %351 = vmatprep.subr.mxu0 0.0
        %352 = vmatpush1.xpose.msra.mxu0 0.0
        %353 = vmatprep.subr.mxu0 0.0
        %354 = vmatpush1.xpose.msra.mxu0 0.0
        %355 = vmatprep.subr.mxu0 0.0
        %356 = vmatpush1.xpose.msra.mxu0 0.0
        %357 = vmatprep.subr.mxu0 0.0
        %358 = vmatpush1.xpose.msra.mxu0 0.0
        %359 = vmatprep.subr.mxu0 0.0
        %360 = vmatpush1.xpose.msra.mxu0 0.0
        %361 = vmatprep.subr.mxu0 0.0
        %362 = vmatpush1.xpose.msra.mxu0 0.0
        %363 = vmatprep.subr.mxu0 0.0
        %364 = vmatpush1.xpose.msra.mxu0 0.0
        %365 = vmatprep.subr.mxu0 0.0
        %366 = vmatpush1.xpose.msra.mxu0 0.0
        %367 = vmatprep.subr.mxu0 0.0
        %368 = vmatpush1.xpose.msra.mxu0 0.0
        %369 = vmatprep.subr.mxu0 0.0
        %370 = vmatpush1.xpose.msra.mxu0 0.0
        %371 = vmatprep.subr.mxu0 0.0
        %372 = vmatpush1.xpose.msra.mxu0 0.0
        %373 = vmatprep.mubr.f32.mxu0 0.0
        %374 = vmatmul.mubr.f32.gmra.mrb[0].mxu0 %v304
        %v375 = vpop.f32.mrb[0].mxu0
        %v376 = vadd.f32 0.0, %v375
        %v377 = vpop.f32.mrb[0].mxu0
        %378 = vdwg.mxu0
        %v379 = vld [vmem:[#allocation3] sm:$0x1]
        %v381 = vlaneseq
        %v382 = vshrl.u32 %v381, 7
        %v383 = vsub.s32 0, %v382
        %v384 = vrot.slane %v379, %v383
        %v386 = vadd.f32 %v300, %v384
        %v387 = vadd.f32 %v386, %v376
        %v388 = vmax.f32 %v387, 0.0
        %vm389 = vcmask 64512
        %390 = vst.msk [vmem:[%s188] sm:$0xff] %vm389, %v388
        %s391 = sand.u32 %s90, 1
        %s392 = scalar_lea.sflag [#allocation5], %s391
        %s393 = sand.u32 %s90, 1
        %s394 = smul.addr %s393, 8
        %s395 = scalar_lea.vmem [#allocation4], %s394
        %s396 = sand.u32 %s118, 1
        %s397 = scalar_lea.sflag [#allocation7], %s396
        %s398 = sand.u32 %s118, 1
        %s399 = smul.addr %s398, 8
        %s400 = scalar_lea.vmem [#allocation6], %s399
        // Predicated region
        $region33: #{tpu_custom_call.1} parent=27 // pred_check
          %p401 = pneg %p100
        $region34: #{tpu_custom_call.1} parent=27 // pred_check_branch
          %403 = sbr.rel (%p401) target = $region36
        $region35: #{tpu_custom_call.1} parent=27 // pred_region
          %s405 = ssub.s32 128, 128
          %406 = vsyncadd %s392, %s405
          %s407 = sadd.s32 %s26, %s25
          %s408 = smul.addr %s407, 128
          %s409 = scalar_lea.hbm %s2, %s408
          %s411 = sshll.u32 %s395, 4
          %s412 = int_to_ptr.vmem [resolvable:$true] %s411
          %414 = dma.vmem_to_hbm [thread:$0]  %s412, 128, %s409, %s392
        $region36: #{tpu_custom_call.1} parent=27 // pred_fallthru
          _
        // Predicated region
        $region37: #{tpu_custom_call.1} parent=27 // pred_check
          %p415 = pneg %p128
        $region38: #{tpu_custom_call.1} parent=27 // pred_check_branch
          %417 = sbr.rel (%p415) target = $region40
        $region39: #{tpu_custom_call.1} parent=27 // pred_region
          %s419 = ssub.s32 128, 128
          %420 = vsyncadd %s397, %s419
          %s421 = sadd.s32 %s26, %s25
          %s422 = smul.addr %s421, 128
          %s423 = scalar_lea.hbm %s3, %s422
          %s425 = sshll.u32 %s400, 4
          %s426 = int_to_ptr.vmem [resolvable:$true] %s425
          %428 = dma.vmem_to_hbm [thread:$0]  %s426, 128, %s423, %s397
        $region40: #{tpu_custom_call.1} parent=27 // pred_fallthru
          _
      $region28: #{tpu_custom_call.1} parent=5 // pred_fallthru
        _
      %p429 = scmp.le.s32.totalorder 2, %s16
      // Predicated region
      $region41: #{tpu_custom_call.1} parent=5 // pred_check
        %p430 = pneg %p429
      $region42: #{tpu_custom_call.1} parent=5 // pred_check_branch
        %432 = sbr.rel (%p430) target = $region44
      $region43: #{tpu_custom_call.1} parent=5 // pred_region
        %s433 = ssub.s32 %s16, 2
        // Predicated region
        $region45: #{tpu_custom_call.1} parent=43 // pred_check
          %p434 = pneg %p106
        $region46: #{tpu_custom_call.1} parent=43 // pred_check_branch
          %436 = sbr.rel (%p434) target = $region48
        $region47: #{tpu_custom_call.1} parent=43 // pred_region
          %s437 = sand.u32 %s91, 1
          %s438 = scalar_lea.sflag [#allocation5], %s437
          %s439 = sand.u32 %s91, 1
          %s440 = smul.addr %s439, 8
          %s441 = scalar_lea.vmem [#allocation4], %s440
          %442 = dma.done %s438, 128
        $region48: #{tpu_custom_call.1} parent=43 // pred_fallthru
          _
        // Predicated region
        $region49: #{tpu_custom_call.1} parent=43 // pred_check
          %p443 = pneg %p134
        $region50: #{tpu_custom_call.1} parent=43 // pred_check_branch
          %445 = sbr.rel (%p443) target = $region52
        $region51: #{tpu_custom_call.1} parent=43 // pred_region
          %s446 = sand.u32 %s119, 1
          %s447 = scalar_lea.sflag [#allocation7], %s446
          %s448 = sand.u32 %s119, 1
          %s449 = smul.addr %s448, 8
          %s450 = scalar_lea.vmem [#allocation6], %s449
          %451 = dma.done %s447, 128
        $region52: #{tpu_custom_call.1} parent=43 // pred_fallthru
          _
      $region44: #{tpu_custom_call.1} parent=5 // pred_fallthru
        _
    $region6: #{tpu_custom_call.1} parent=1 // loop_footer
      %s20 = sadd.s32 1, %s16
    $region7: #{tpu_custom_call.1} parent=1 // loop_footer_branch
      %15 = sbr.rel target = $region3
    $region8: #{tpu_custom_call.1} parent=1 // loop_exit
      _
    %452 = vsyncpa [#allocation5], 1
    %s453 = scalar_lea.sflag [#allocation5], 1
    %454 = vsyncpa %s453, 1
    %455 = vsyncpa [#allocation7], 1
    %s456 = scalar_lea.sflag [#allocation7], 1
    %457 = vsyncpa %s456, 1

</llo_original>
